<compile_context>
chip_gen: v7x
topology: tpu7x:2x2x1
jax: 0.10.0
libtpu: 0.0.40
codegen_flags: <defaults>
</compile_context>

<pallas_src>
import functools
import math

import jax
import jax.numpy as jnp
from jax.experimental import pallas as pl
from jax.experimental.pallas import tpu as pltpu

NEG_SLOPE = 0.2   # LeakyReLU(0.2)
LANE = 128        # TPU lane width


def _round_up(x, m):
    return (x + m - 1) // m * m


# ---------------------------------------------------------------------------
# Kernel: fused n_layers x (Linear -> LeakyReLU(0.2)) on one batch tile.
# ---------------------------------------------------------------------------
def _make_disc_kernel(n_layers, out_features):
    def kernel(*refs):
        x_ref = refs[0]
        out_ref = refs[-1]
        param_refs = refs[1:-1]          # (w0, b0, w1, b1, ...)

        # f32 input at natural width -> bf16 MXU operand (cast in-VMEM).
        h = x_ref[...].astype(jnp.bfloat16)
        acc = None
        # Static Python loop: fully unrolled so the LLO scheduler can overlap
        # the next layer's weight loads under the current matmul.
        for i in range(n_layers):
            w = param_refs[2 * i][...]           # bf16 (in, out_p)
            b = param_refs[2 * i + 1][...]       # f32  (1, out_p)
            acc = jnp.dot(h, w, preferred_element_type=jnp.float32) + b
            acc = jnp.maximum(acc, NEG_SLOPE * acc)          # LeakyReLU, f32
            h = acc.astype(jnp.bfloat16)                     # next MXU operand
        # Narrow store: only the real output columns go back to HBM.
        out_ref[...] = acc[:, :out_features].astype(out_ref.dtype)

    return kernel


# ---------------------------------------------------------------------------
# Wrapper
# ---------------------------------------------------------------------------
@functools.partial(jax.jit, static_argnames=("out_features", "batch_tile"))
def discriminator_forward(x, weights, biases, out_features=1, batch_tile=2048):
    """Run the fused Discriminator MLP as one pallas_call.

    x:        (B, in_features) float32, natural (unpadded) feature width
    weights:  tuple of bf16 arrays, shape (in, out_padded); first layer keeps
              its natural in-dim, all out-dims padded to 128 lanes
    biases:   tuple of f32 arrays, shape (1, out_padded)
    Returns:  (B, out_features) float32
    """
    B, d_in = x.shape
    n_layers = len(weights)

    # Batch tiling: sublane-aligned tile; aim for >= 2 grid steps whenever the
    # batch allows so ("parallel",) shards across v7x's two TensorCores.
    batch_tile = max(8, _round_up(batch_tile, 8))
    Bp8 = _round_up(B, 8)
    if Bp8 >= 16:
        half = _round_up((Bp8 + 1) // 2, 8)
        tile = min(batch_tile, half)
    else:
        tile = Bp8
    Bp = _round_up(B, tile)

    # Only wrapper work left: batch padding (skipped when B is already aligned).
    xp = x if Bp == B else jnp.pad(x, ((0, Bp - B), (0, 0)))

    # x block: last dim equals the full array dim -> legal even though 32<128.
    in_specs = [pl.BlockSpec((tile, d_in), lambda i: (i, 0))]
    args = [xp]
    for w, b in zip(weights, biases):
        # Constant index_map -> loaded once, VMEM-resident across grid steps.
        in_specs.append(pl.BlockSpec(w.shape, lambda i: (0, 0)))
        in_specs.append(pl.BlockSpec(b.shape, lambda i: (0, 0)))
        args.append(w)
        args.append(b)

    out = pl.pallas_call(
        _make_disc_kernel(n_layers, out_features),
        out_shape=jax.ShapeDtypeStruct((Bp, out_features), jnp.float32),
        grid=(Bp // tile,),
        in_specs=in_specs,
        out_specs=pl.BlockSpec((tile, out_features), lambda i: (i, 0)),
        compiler_params=pltpu.CompilerParams(
            dimension_semantics=("parallel",)),
    )(*args)

    return out if Bp == B else out[:B]


# ---------------------------------------------------------------------------
# Parameter construction (mimics PyTorch nn.Linear default init) + padding
# ---------------------------------------------------------------------------
def build_discriminator_params(key, input_dim, dim):
    """Master f32 params stored as (in, out) == PyTorch weight.T."""
    layer_dims = [(input_dim, input_dim), (input_dim, dim), (dim, 1)]
    keys = jax.random.split(key, len(layer_dims))
    ws, bs = [], []
    for k, (i, o) in zip(keys, layer_dims):
        kw, kb = jax.random.split(k)
        bound = 1.0 / math.sqrt(i)
        ws.append(jax.random.uniform(kw, (i, o), jnp.float32, -bound, bound))
        bs.append(jax.random.uniform(kb, (1, o), jnp.float32, -bound, bound))
    return tuple(ws), tuple(bs)


def pad_discriminator_params(ws, bs):
    """Pad feature dims to 128 lanes; weights -> bf16, biases stay f32.

    Layer 0 keeps its natural in-dim (it contracts against the raw x);
    subsequent in-dims and all out-dims are padded to multiples of 128 so the
    internal activation chain is lane-dense.  Padded entries are exactly zero.
    """
    pws, pbs = [], []
    for li, (w, b) in enumerate(zip(ws, bs)):
        din, dout = w.shape
        dip = din if li == 0 else _round_up(din, LANE)
        dop = _round_up(dout, LANE)
        wp = jnp.zeros((dip, dop), jnp.bfloat16)
        wp = wp.at[:din, :dout].set(w.astype(jnp.bfloat16))
        bp = jnp.zeros((1, dop), jnp.float32)
        bp = bp.at[:, :dout].set(b.astype(jnp.float32))
        pws.append(wp)
        pbs.append(bp)
    return tuple(pws), tuple(pbs)


# ---------------------------------------------------------------------------
# Pure-JAX reference (same bf16-operand / f32-accumulate math)
# ---------------------------------------------------------------------------
def _ref_forward(x, ws, bs):
    h = x.astype(jnp.float32)
    for w, b in zip(ws, bs):
        h = jnp.dot(h.astype(jnp.bfloat16), w.astype(jnp.bfloat16),
                    preferred_element_type=jnp.float32) + b
        h = jnp.where(h > 0, h, NEG_SLOPE * h)
    return h


if __name__ == "__main__":
    input_dim, dim, batch = 32, 16, 40   # batch not a multiple of the tile on purpose

    key = jax.random.PRNGKey(0)
    k_params, k_x = jax.random.split(key)

    ws, bs = build_discriminator_params(k_params, input_dim, dim)
    pws, pbs = pad_discriminator_params(ws, bs)

    x = jax.random.normal(k_x, (batch, input_dim), jnp.float32)

    # batch_tile=16 here to exercise the multi-step (grid=3) tiled path at a
    # small test size; default is 2048 for real workloads.
    out = discriminator_forward(x, pws, pbs, out_features=1, batch_tile=16)
    out = jax.block_until_ready(out)

    ref = _ref_forward(x, ws, bs)
    assert out.shape == (batch, 1)
    assert jnp.allclose(out, ref, atol=1e-3, rtol=1e-3), float(
        jnp.max(jnp.abs(out - ref)))

    print("KERNEL_OK")
</pallas_src>

<mosaic_0001>
module attributes {stable_mosaic.version = 11 : i64} {
  func.func @kernel(%arg0: i32, %arg1: memref<16x32xf32, #tpu.memory_space<vmem>>, %arg2: memref<32x128xbf16, #tpu.memory_space<vmem>>, %arg3: memref<1x128xf32, #tpu.memory_space<vmem>>, %arg4: memref<128x128xbf16, #tpu.memory_space<vmem>>, %arg5: memref<1x128xf32, #tpu.memory_space<vmem>>, %arg6: memref<128x128xbf16, #tpu.memory_space<vmem>>, %arg7: memref<1x128xf32, #tpu.memory_space<vmem>>, %arg8: memref<16x1xf32, #tpu.memory_space<vmem>>) attributes {dimension_semantics = [#tpu.dimension_semantics<parallel>], iteration_bounds = array<i64: 3>, scalar_prefetch = 0 : i64, scratch_operands = 0 : i64, tpu.core_type = #tpu.core_type<tc>, window_params = [{transform_indices = @transform_0, window_bounds = array<i64: 16, 32>}, {pipeline_mode = #tpu.pipeline_mode<synchronous>, transform_indices = @transform_1, window_bounds = array<i64: 32, 128>}, {pipeline_mode = #tpu.pipeline_mode<synchronous>, transform_indices = @transform_2, window_bounds = array<i64: 1, 128>}, {pipeline_mode = #tpu.pipeline_mode<synchronous>, transform_indices = @transform_3, window_bounds = array<i64: 128, 128>}, {pipeline_mode = #tpu.pipeline_mode<synchronous>, transform_indices = @transform_4, window_bounds = array<i64: 1, 128>}, {pipeline_mode = #tpu.pipeline_mode<synchronous>, transform_indices = @transform_5, window_bounds = array<i64: 128, 128>}, {pipeline_mode = #tpu.pipeline_mode<synchronous>, transform_indices = @transform_6, window_bounds = array<i64: 1, 128>}, {transform_indices = @transform_7, window_bounds = array<i64: 16, 1>}]} {
    %c0 = arith.constant 0 : index
    %c0_0 = arith.constant 0 : index
    %0 = vector.load %arg1[%c0, %c0_0] : memref<16x32xf32, #tpu.memory_space<vmem>>, vector<16x32xf32>
    %1 = arith.truncf %0 : vector<16x32xf32> to vector<16x32xbf16>
    %c0_1 = arith.constant 0 : index
    %c0_2 = arith.constant 0 : index
    %2 = vector.load %arg2[%c0_1, %c0_2] : memref<32x128xbf16, #tpu.memory_space<vmem>>, vector<32x128xbf16>
    %c0_3 = arith.constant 0 : index
    %c0_4 = arith.constant 0 : index
    %3 = vector.load %arg3[%c0_3, %c0_4] : memref<1x128xf32, #tpu.memory_space<vmem>>, vector<1x128xf32>
    %cst = arith.constant dense<0.000000e+00> : vector<16x128xf32>
    %4 = tpu.matmul %1, %2, %cst {dimension_numbers = #tpu.dot_dimension_numbers<[1], [0], [0], [1], [0, 0, 1, 1], [], []>} : vector<16x32xbf16>, vector<32x128xbf16>, vector<16x128xf32> -> vector<16x128xf32>
    %5 = vector.broadcast %3 : vector<1x128xf32> to vector<16x128xf32>
    %6 = arith.addf %4, %5 : vector<16x128xf32>
    %cst_5 = arith.constant 2.000000e-01 : f32
    %7 = vector.broadcast %cst_5 : f32 to vector<16x128xf32>
    %8 = arith.mulf %7, %6 : vector<16x128xf32>
    %9 = arith.maximumf %6, %8 : vector<16x128xf32>
    %10 = arith.truncf %9 : vector<16x128xf32> to vector<16x128xbf16>
    %c0_6 = arith.constant 0 : index
    %c0_7 = arith.constant 0 : index
    %11 = vector.load %arg4[%c0_6, %c0_7] : memref<128x128xbf16, #tpu.memory_space<vmem>>, vector<128x128xbf16>
    %c0_8 = arith.constant 0 : index
    %c0_9 = arith.constant 0 : index
    %12 = vector.load %arg5[%c0_8, %c0_9] : memref<1x128xf32, #tpu.memory_space<vmem>>, vector<1x128xf32>
    %cst_10 = arith.constant dense<0.000000e+00> : vector<16x128xf32>
    %13 = tpu.matmul %10, %11, %cst_10 {dimension_numbers = #tpu.dot_dimension_numbers<[1], [0], [0], [1], [0, 0, 1, 1], [], []>} : vector<16x128xbf16>, vector<128x128xbf16>, vector<16x128xf32> -> vector<16x128xf32>
    %14 = vector.broadcast %12 : vector<1x128xf32> to vector<16x128xf32>
    %15 = arith.addf %13, %14 : vector<16x128xf32>
    %cst_11 = arith.constant 2.000000e-01 : f32
    %16 = vector.broadcast %cst_11 : f32 to vector<16x128xf32>
    %17 = arith.mulf %16, %15 : vector<16x128xf32>
    %18 = arith.maximumf %15, %17 : vector<16x128xf32>
    %19 = arith.truncf %18 : vector<16x128xf32> to vector<16x128xbf16>
    %c0_12 = arith.constant 0 : index
    %c0_13 = arith.constant 0 : index
    %20 = vector.load %arg6[%c0_12, %c0_13] : memref<128x128xbf16, #tpu.memory_space<vmem>>, vector<128x128xbf16>
    %c0_14 = arith.constant 0 : index
    %c0_15 = arith.constant 0 : index
    %21 = vector.load %arg7[%c0_14, %c0_15] : memref<1x128xf32, #tpu.memory_space<vmem>>, vector<1x128xf32>
    %cst_16 = arith.constant dense<0.000000e+00> : vector<16x128xf32>
    %22 = tpu.matmul %19, %20, %cst_16 {dimension_numbers = #tpu.dot_dimension_numbers<[1], [0], [0], [1], [0, 0, 1, 1], [], []>} : vector<16x128xbf16>, vector<128x128xbf16>, vector<16x128xf32> -> vector<16x128xf32>
    %23 = vector.broadcast %21 : vector<1x128xf32> to vector<16x128xf32>
    %24 = arith.addf %22, %23 : vector<16x128xf32>
    %cst_17 = arith.constant 2.000000e-01 : f32
    %25 = vector.broadcast %cst_17 : f32 to vector<16x128xf32>
    %26 = arith.mulf %25, %24 : vector<16x128xf32>
    %27 = arith.maximumf %24, %26 : vector<16x128xf32>
    %28 = vector.extract_strided_slice %27 {offsets = [0, 0], sizes = [16, 1], strides = [1, 1]} : vector<16x128xf32> to vector<16x1xf32>
    %c0_18 = arith.constant 0 : index
    %c0_19 = arith.constant 0 : index
    %29 = vector.load %arg8[%c0_18, %c0_19] : memref<16x1xf32, #tpu.memory_space<vmem>>, vector<16x1xf32>
    tpu.vector_store %arg8[%c0_18, %c0_19], %28 {strides = array<i32>} : memref<16x1xf32, #tpu.memory_space<vmem>>, vector<16x1xf32>,
    return
  }
  func.func @transform_0(%arg0: i32) -> (i32, i32) {
    %c0_i32 = arith.constant 0 : i32
    %c0_i32_0 = arith.constant 0 : i32
    return %arg0, %c0_i32 : i32, i32
  }
  func.func @transform_1(%arg0: i32) -> (i32, i32) {
    %c0_i32 = arith.constant 0 : i32
    %c0_i32_0 = arith.constant 0 : i32
    %c0_i32_1 = arith.constant 0 : i32
    return %c0_i32, %c0_i32_0 : i32, i32
  }
  func.func @transform_2(%arg0: i32) -> (i32, i32) {
    %c0_i32 = arith.constant 0 : i32
    %c0_i32_0 = arith.constant 0 : i32
    %c0_i32_1 = arith.constant 0 : i32
    return %c0_i32, %c0_i32_0 : i32, i32
  }
  func.func @transform_3(%arg0: i32) -> (i32, i32) {
    %c0_i32 = arith.constant 0 : i32
    %c0_i32_0 = arith.constant 0 : i32
    %c0_i32_1 = arith.constant 0 : i32
    return %c0_i32, %c0_i32_0 : i32, i32
  }
  func.func @transform_4(%arg0: i32) -> (i32, i32) {
    %c0_i32 = arith.constant 0 : i32
    %c0_i32_0 = arith.constant 0 : i32
    %c0_i32_1 = arith.constant 0 : i32
    return %c0_i32, %c0_i32_0 : i32, i32
  }
  func.func @transform_5(%arg0: i32) -> (i32, i32) {
    %c0_i32 = arith.constant 0 : i32
    %c0_i32_0 = arith.constant 0 : i32
    %c0_i32_1 = arith.constant 0 : i32
    return %c0_i32, %c0_i32_0 : i32, i32
  }
  func.func @transform_6(%arg0: i32) -> (i32, i32) {
    %c0_i32 = arith.constant 0 : i32
    %c0_i32_0 = arith.constant 0 : i32
    %c0_i32_1 = arith.constant 0 : i32
    return %c0_i32, %c0_i32_0 : i32, i32
  }
  func.func @transform_7(%arg0: i32) -> (i32, i32) {
    %c0_i32 = arith.constant 0 : i32
    %c0_i32_0 = arith.constant 0 : i32
    return %arg0, %c0_i32 : i32, i32
  }
}

</mosaic_0001>

<llo_original>
// kernel: discriminator_forward.1
$region0: #{discriminator_forward.1}
  #allocation0 [shape = 'u32[]', space=smem, size = 0x4, offset = 0x4, fixed_abs, tag = 'smem constant byte address 0x4 - core index']
  #allocation1 [shape = 'u32[144,128]{1,0:T(1,128)}', space=vmem, size = 0x12000, scoped, tag = 'internal scratch']
  %s0 = inlined_call_operand.vmem [shape: f32[48,32], index: 0, kind: input, shape index: {}]
  %s1 = inlined_call_operand.vmem [shape: bf16[32,128], index: 1, kind: input, shape index: {}]
  %s2 = inlined_call_operand.vmem [shape: f32[1,128], index: 2, kind: input, shape index: {}]
  %s3 = inlined_call_operand.vmem [shape: bf16[128,128], index: 3, kind: input, shape index: {}]
  %s4 = inlined_call_operand.vmem [shape: f32[1,128], index: 4, kind: input, shape index: {}]
  %s5 = inlined_call_operand.vmem [shape: bf16[128,128], index: 5, kind: input, shape index: {}]
  %s6 = inlined_call_operand.vmem [shape: f32[1,128], index: 6, kind: input, shape index: {}]
  %s7 = inlined_call_operand.vmem [shape: f32[48,1], index: 7, kind: output, shape index: {}]
  %s8 = sld [smem:[#allocation0]]
  $region61: #{discriminator_forward.1} parent=0
    _
  %s10 = ssub.s32 1, %s8
  %s11 = scalar_select 0, %s10, %s8
  loop: start=0, step=1, limit=5
  $region2: #{discriminator_forward.1} parent=0 // loop_pre_header
    _
  $region3: #{discriminator_forward.1} parent=0 // loop_header
    %s13 = sphi 0, %s17
    %p14 = scmp.ge.s32.totalorder %s13, 5
    %s23 = sphi 0, %s25
    %s26 = sphi 0, %s23
    %s27 = sphi 0, %s26
    %s43 = sphi 0, %s27
    %s47 = sphi 0, %s47
    %s49 = sphi 0, %s47
    %s50 = sphi 0, %s49
    %s64 = sphi 0, %s50
    %s68 = sphi 0, %s68
    %s70 = sphi 0, %s68
    %s71 = sphi 0, %s70
    %s85 = sphi 0, %s71
    %s89 = sphi 0, %s89
    %s91 = sphi 0, %s89
    %s92 = sphi 0, %s91
    %s106 = sphi 0, %s92
    %s110 = sphi 0, %s110
    %s112 = sphi 0, %s110
    %s113 = sphi 0, %s112
    %s127 = sphi 0, %s113
    %s131 = sphi 0, %s131
    %s133 = sphi 0, %s131
    %s134 = sphi 0, %s133
    %s148 = sphi 0, %s134
    %s152 = sphi 0, %s152
    %s154 = sphi 0, %s152
    %s155 = sphi 0, %s154
    %s169 = sphi 0, %s155
    %s175 = sphi 0, %s177
    %s178 = sphi 0, %s175
    %s179 = sphi 0, %s178
    %s195 = sphi 0, %s179
  $region4: #{discriminator_forward.1} parent=0 // loop_header_branch
    %16 = sbr.rel (%p14) target = $region8
  $region5: #{discriminator_forward.1} parent=0 // loop_body
    %s18 = ssub.s32 %s13, 1
    %s19 = ssub.s32 %s13, 2
    %s20 = sadd.s32 %s13, 1
    %s21 = ssub.s32 %s13, %s20
    %p22 = scmp.eq.s32.totalorder %s21, 0
    %s24 = sadd.s32 %s23, 1
    %s25 = scalar_select %p22, %s23, %s24
    %p28 = pneg %p22
    %p29 = scmp.eq.s32.totalorder %s13, 2
    %p30 = por %p28, %p29
    %p31 = scmp.ne.s32.totalorder %s23, %s26
    %p32 = scmp.eq.s32.totalorder %s13, 0
    %p33 = por %p31, %p32
    %p34 = scmp.ne.s32.totalorder %s23, %s26
    %p35 = scmp.eq.s32.totalorder %s18, 2
    %p36 = por %p34, %p35
    %p37 = scmp.ne.s32.totalorder %s26, %s27
    %p38 = scmp.eq.s32.totalorder %s18, 0
    %p39 = por %p37, %p38
    %p40 = scmp.ne.s32.totalorder %s26, %s27
    %p41 = scmp.eq.s32.totalorder %s19, 2
    %p42 = por %p40, %p41
    %p44 = scmp.ne.s32.totalorder %s27, %s43
    %p45 = scmp.eq.s32.totalorder %s19, 0
    %p46 = por %p44, %p45
    %s48 = sadd.s32 %s47, 1
    %p51 = scmp.eq.s32.totalorder %s13, 2
    %p52 = scmp.ne.s32.totalorder %s47, %s49
    %p53 = scmp.eq.s32.totalorder %s13, 0
    %p54 = por %p52, %p53
    %p55 = scmp.ne.s32.totalorder %s47, %s49
    %p56 = scmp.eq.s32.totalorder %s18, 2
    %p57 = por %p55, %p56
    %p58 = scmp.ne.s32.totalorder %s49, %s50
    %p59 = scmp.eq.s32.totalorder %s18, 0
    %p60 = por %p58, %p59
    %p61 = scmp.ne.s32.totalorder %s49, %s50
    %p62 = scmp.eq.s32.totalorder %s19, 2
    %p63 = por %p61, %p62
    %p65 = scmp.ne.s32.totalorder %s50, %s64
    %p66 = scmp.eq.s32.totalorder %s19, 0
    %p67 = por %p65, %p66
    %s69 = sadd.s32 %s68, 1
    %p72 = scmp.eq.s32.totalorder %s13, 2
    %p73 = scmp.ne.s32.totalorder %s68, %s70
    %p74 = scmp.eq.s32.totalorder %s13, 0
    %p75 = por %p73, %p74
    %p76 = scmp.ne.s32.totalorder %s68, %s70
    %p77 = scmp.eq.s32.totalorder %s18, 2
    %p78 = por %p76, %p77
    %p79 = scmp.ne.s32.totalorder %s70, %s71
    %p80 = scmp.eq.s32.totalorder %s18, 0
    %p81 = por %p79, %p80
    %p82 = scmp.ne.s32.totalorder %s70, %s71
    %p83 = scmp.eq.s32.totalorder %s19, 2
    %p84 = por %p82, %p83
    %p86 = scmp.ne.s32.totalorder %s71, %s85
    %p87 = scmp.eq.s32.totalorder %s19, 0
    %p88 = por %p86, %p87
    %s90 = sadd.s32 %s89, 1
    %p93 = scmp.eq.s32.totalorder %s13, 2
    %p94 = scmp.ne.s32.totalorder %s89, %s91
    %p95 = scmp.eq.s32.totalorder %s13, 0
    %p96 = por %p94, %p95
    %p97 = scmp.ne.s32.totalorder %s89, %s91
    %p98 = scmp.eq.s32.totalorder %s18, 2
    %p99 = por %p97, %p98
    %p100 = scmp.ne.s32.totalorder %s91, %s92
    %p101 = scmp.eq.s32.totalorder %s18, 0
    %p102 = por %p100, %p101
    %p103 = scmp.ne.s32.totalorder %s91, %s92
    %p104 = scmp.eq.s32.totalorder %s19, 2
    %p105 = por %p103, %p104
    %p107 = scmp.ne.s32.totalorder %s92, %s106
    %p108 = scmp.eq.s32.totalorder %s19, 0
    %p109 = por %p107, %p108
    %s111 = sadd.s32 %s110, 1
    %p114 = scmp.eq.s32.totalorder %s13, 2
    %p115 = scmp.ne.s32.totalorder %s110, %s112
    %p116 = scmp.eq.s32.totalorder %s13, 0
    %p117 = por %p115, %p116
    %p118 = scmp.ne.s32.totalorder %s110, %s112
    %p119 = scmp.eq.s32.totalorder %s18, 2
    %p120 = por %p118, %p119
    %p121 = scmp.ne.s32.totalorder %s112, %s113
    %p122 = scmp.eq.s32.totalorder %s18, 0
    %p123 = por %p121, %p122
    %p124 = scmp.ne.s32.totalorder %s112, %s113
    %p125 = scmp.eq.s32.totalorder %s19, 2
    %p126 = por %p124, %p125
    %p128 = scmp.ne.s32.totalorder %s113, %s127
    %p129 = scmp.eq.s32.totalorder %s19, 0
    %p130 = por %p128, %p129
    %s132 = sadd.s32 %s131, 1
    %p135 = scmp.eq.s32.totalorder %s13, 2
    %p136 = scmp.ne.s32.totalorder %s131, %s133
    %p137 = scmp.eq.s32.totalorder %s13, 0
    %p138 = por %p136, %p137
    %p139 = scmp.ne.s32.totalorder %s131, %s133
    %p140 = scmp.eq.s32.totalorder %s18, 2
    %p141 = por %p139, %p140
    %p142 = scmp.ne.s32.totalorder %s133, %s134
    %p143 = scmp.eq.s32.totalorder %s18, 0
    %p144 = por %p142, %p143
    %p145 = scmp.ne.s32.totalorder %s133, %s134
    %p146 = scmp.eq.s32.totalorder %s19, 2
    %p147 = por %p145, %p146
    %p149 = scmp.ne.s32.totalorder %s134, %s148
    %p150 = scmp.eq.s32.totalorder %s19, 0
    %p151 = por %p149, %p150
    %s153 = sadd.s32 %s152, 1
    %p156 = scmp.eq.s32.totalorder %s13, 2
    %p157 = scmp.ne.s32.totalorder %s152, %s154
    %p158 = scmp.eq.s32.totalorder %s13, 0
    %p159 = por %p157, %p158
    %p160 = scmp.ne.s32.totalorder %s152, %s154
    %p161 = scmp.eq.s32.totalorder %s18, 2
    %p162 = por %p160, %p161
    %p163 = scmp.ne.s32.totalorder %s154, %s155
    %p164 = scmp.eq.s32.totalorder %s18, 0
    %p165 = por %p163, %p164
    %p166 = scmp.ne.s32.totalorder %s154, %s155
    %p167 = scmp.eq.s32.totalorder %s19, 2
    %p168 = por %p166, %p167
    %p170 = scmp.ne.s32.totalorder %s155, %s169
    %p171 = scmp.eq.s32.totalorder %s19, 0
    %p172 = por %p170, %p171
    %s173 = ssub.s32 %s13, %s20
    %p174 = scmp.eq.s32.totalorder %s173, 0
    %s176 = sadd.s32 %s175, 1
    %s177 = scalar_select %p174, %s175, %s176
    %p180 = pneg %p174
    %p181 = scmp.eq.s32.totalorder %s13, 2
    %p182 = por %p180, %p181
    %p183 = scmp.ne.s32.totalorder %s175, %s178
    %p184 = scmp.eq.s32.totalorder %s13, 0
    %p185 = por %p183, %p184
    %p186 = scmp.ne.s32.totalorder %s175, %s178
    %p187 = scmp.eq.s32.totalorder %s18, 2
    %p188 = por %p186, %p187
    %p189 = scmp.ne.s32.totalorder %s178, %s179
    %p190 = scmp.eq.s32.totalorder %s18, 0
    %p191 = por %p189, %p190
    %p192 = scmp.ne.s32.totalorder %s178, %s179
    %p193 = scmp.eq.s32.totalorder %s19, 2
    %p194 = por %p192, %p193
    %p196 = scmp.ne.s32.totalorder %s179, %s195
    %p197 = scmp.eq.s32.totalorder %s19, 0
    %p198 = por %p196, %p197
    %p199 = scmp.le.s32.totalorder 1, %s13
    %p200 = scmp.lt.s32.totalorder %s13, 4
    %p201 = pnand %p199, %p200
    %p202 = pneg %p201
    // Predicated region
    $region9: #{discriminator_forward.1} parent=5 // pred_check
      _
    $region10: #{discriminator_forward.1} parent=5 // pred_check_branch
      %204 = sbr.rel (%p201) target = $region12
    $region11: #{discriminator_forward.1} parent=5 // pred_region
      %s205 = ssub.s32 %s13, 1
      // Predicated region
      $region13: #{discriminator_forward.1} parent=11 // pred_check
        %p206 = pneg %p60
      $region14: #{discriminator_forward.1} parent=11 // pred_check_branch
        %208 = sbr.rel (%p206) target = $region16
      $region15: #{discriminator_forward.1} parent=11 // pred_region
        _
      $region16: #{discriminator_forward.1} parent=11 // pred_fallthru
        _
      // Predicated region
      $region17: #{discriminator_forward.1} parent=11 // pred_check
        %p209 = pneg %p81
      $region18: #{discriminator_forward.1} parent=11 // pred_check_branch
        %211 = sbr.rel (%p209) target = $region20
      $region19: #{discriminator_forward.1} parent=11 // pred_region
        _
      $region20: #{discriminator_forward.1} parent=11 // pred_fallthru
        _
      // Predicated region
      $region21: #{discriminator_forward.1} parent=11 // pred_check
        %p212 = pneg %p102
      $region22: #{discriminator_forward.1} parent=11 // pred_check_branch
        %214 = sbr.rel (%p212) target = $region24
      $region23: #{discriminator_forward.1} parent=11 // pred_region
        _
      $region24: #{discriminator_forward.1} parent=11 // pred_fallthru
        _
      // Predicated region
      $region25: #{discriminator_forward.1} parent=11 // pred_check
        %p215 = pneg %p123
      $region26: #{discriminator_forward.1} parent=11 // pred_check_branch
        %217 = sbr.rel (%p215) target = $region28
      $region27: #{discriminator_forward.1} parent=11 // pred_region
        _
      $region28: #{discriminator_forward.1} parent=11 // pred_fallthru
        _
      // Predicated region
      $region29: #{discriminator_forward.1} parent=11 // pred_check
        %p218 = pneg %p144
      $region30: #{discriminator_forward.1} parent=11 // pred_check_branch
        %220 = sbr.rel (%p218) target = $region32
      $region31: #{discriminator_forward.1} parent=11 // pred_region
        _
      $region32: #{discriminator_forward.1} parent=11 // pred_fallthru
        _
      // Predicated region
      $region33: #{discriminator_forward.1} parent=11 // pred_check
        %p221 = pneg %p165
      $region34: #{discriminator_forward.1} parent=11 // pred_check_branch
        %223 = sbr.rel (%p221) target = $region36
      $region35: #{discriminator_forward.1} parent=11 // pred_region
        _
      $region36: #{discriminator_forward.1} parent=11 // pred_fallthru
        _
    $region12: #{discriminator_forward.1} parent=5 // pred_fallthru
      _
    %p224 = scmp.lt.s32.totalorder %s13, 3
    // Predicated region
    $region37: #{discriminator_forward.1} parent=5 // pred_check
      %p225 = pneg %p224
    $region38: #{discriminator_forward.1} parent=5 // pred_check_branch
      %227 = sbr.rel (%p225) target = $region40
    $region39: #{discriminator_forward.1} parent=5 // pred_region
      // Predicated region
      $region41: #{discriminator_forward.1} parent=39 // pred_check
        %p228 = pneg %p33
      $region42: #{discriminator_forward.1} parent=39 // pred_check_branch
        %230 = sbr.rel (%p228) target = $region44
      $region43: #{discriminator_forward.1} parent=39 // pred_region
        %s231 = smul.u32 2, %s13
        %p232 = scmp.lt.s32.totalorder %s231, 5
        %s233 = scalar_select %p232, %s231, 5
        %s234 = smul.addr %s233, 8
        %s235 = scalar_lea.vmem %s0, %s234
        %s236 = smul.u32 2, %s13
      $region44: #{discriminator_forward.1} parent=39 // pred_fallthru
        _
    $region40: #{discriminator_forward.1} parent=5 // pred_fallthru
      _
    %p237 = scmp.le.s32.totalorder 1, %s13
    %p238 = scmp.lt.s32.totalorder %s13, 4
    %p239 = pnand %p237, %p238
    %p240 = pneg %p239
    // Predicated region
    $region45: #{discriminator_forward.1} parent=5 // pred_check
      _
    $region46: #{discriminator_forward.1} parent=5 // pred_check_branch
      %242 = sbr.rel (%p239) target = $region48
    $region47: #{discriminator_forward.1} parent=5 // pred_region
      %s243 = ssub.s32 %s13, 1
      %s244 = smul.u32 2, %s18
      %p245 = scmp.lt.s32.totalorder %s244, 5
      %s246 = scalar_select %p245, %s244, 5
      %s247 = smul.addr %s246, 8
      %s248 = scalar_lea.vmem %s0, %s247
      %p249 = pneg %p39
      %p250 = pneg %p36
      %p251 = pneg %p60
      %p252 = pneg %p57
      %p253 = pneg %p81
      %p254 = pneg %p78
      %p255 = pneg %p102
      %p256 = pneg %p99
      %p257 = pneg %p123
      %p258 = pneg %p120
      %p259 = pneg %p144
      %p260 = pneg %p141
      %p261 = pneg %p165
      %p262 = pneg %p162
      %p263 = pneg %p191
      %p264 = pneg %p188
      %s265 = smul.u32 2, %s18
      %p266 = scmp.lt.s32.totalorder %s265, 5
      %s267 = scalar_select %p266, %s265, 5
      %s268 = smul.addr %s267, 8
      %s269 = scalar_lea.vmem %s7, %s268
      %s270 = smul.u32 2, %s18
      %p271 = scmp.lt.s32.totalorder %s270, 5
      %s272 = scalar_select %p271, %s270, 5
      %s273 = smul.addr %s272, 8
      %s274 = scalar_lea.vmem %s0, %s273
      %s275 = smul.u32 2, %s18
      %s276 = smul.u32 2, %s18
      %p277 = scmp.lt.s32.totalorder %s276, 5
      %s278 = scalar_select %p277, %s276, 5
      %s279 = smul.addr %s278, 8
      %s280 = scalar_lea.vmem %s7, %s279
      %s281 = smul.u32 2, %s18
      %v283 = vld [vmem:[%s274] sm:$0xff]
      %v284 = vld [vmem:[%s274 + $0x8] sm:$0xff]
      %v285 = vpack.c.bf16 %v284, %v283
      %v286 = vld [vmem:[%s1] sm:$0xf]
      %v287 = vld [vmem:[%s1 + $0x4] sm:$0xf]
      %v288 = vld [vmem:[%s1 + $0x8] sm:$0xf]
      %v289 = vld [vmem:[%s1 + $0xc] sm:$0xf]
      %v290 = vld [vmem:[%s2] sm:$0x1]
      %v292 = vlaneseq
      %v293 = vshrl.u32 %v292, 7
      %v294 = vsub.s32 0, %v293
      %v295 = vrot.slane %v290, %v294
      %v301 = vunpack.c.l.b16 %v286
      %v302 = vunpack.c.l.b16 %v287
      %v303 = vunpack.c.l.b16 %v288
      %v304 = vunpack.c.l.b16 %v289
      %v305 = vpack.c.b16 %v302, %v301
      %v306 = vpack.c.b16 %v304, %v303
      %vm309 = vcmask 261120
      %v311 = vsel %vm309, %v285, 0
      %313 = vmatprep.subr.bf16.mxu0 0
      %314 = vmatpush1.bf16.msra.mxu0 %v305
      %315 = vmatprep.subr.bf16.mxu0 0
      %316 = vmatpush1.bf16.msra.mxu0 %v306
      %317 = vmatprep.subr.bf16.mxu0 0
      %318 = vmatpush1.bf16.msra.mxu0 0
      %319 = vmatprep.subr.bf16.mxu0 0
      %320 = vmatpush1.bf16.msra.mxu0 0
      %321 = vmatprep.subr.bf16.mxu0 0
      %322 = vmatpush1.bf16.msra.mxu0 0
      %323 = vmatprep.subr.bf16.mxu0 0
      %324 = vmatpush1.bf16.msra.mxu0 0
      %325 = vmatprep.subr.bf16.mxu0 0
      %326 = vmatpush1.bf16.msra.mxu0 0
      %327 = vmatprep.subr.bf16.mxu0 0
      %328 = vmatpush1.bf16.msra.mxu0 0
      %329 = vmatprep.subr.bf16.mxu0 0
      %330 = vmatpush1.bf16.msra.mxu0 0
      %331 = vmatprep.subr.bf16.mxu0 0
      %332 = vmatpush1.bf16.msra.mxu0 0
      %333 = vmatprep.subr.bf16.mxu0 0
      %334 = vmatpush1.bf16.msra.mxu0 0
      %335 = vmatprep.subr.bf16.mxu0 0
      %336 = vmatpush1.bf16.msra.mxu0 0
      %337 = vmatprep.subr.bf16.mxu0 0
      %338 = vmatpush1.bf16.msra.mxu0 0
      %339 = vmatprep.subr.bf16.mxu0 0
      %340 = vmatpush1.bf16.msra.mxu0 0
      %341 = vmatprep.subr.bf16.mxu0 0
      %342 = vmatpush1.bf16.msra.mxu0 0
      %343 = vmatprep.subr.bf16.mxu0 0
      %344 = vmatpush1.bf16.msra.mxu0 0
      %345 = vmatprep.mubr.bf16.mxu0 0
      %346 = vmatmul.mubr.bf16.gmra.mrb[0].mxu0 %v311
      %v347 = vpop.f32.mrb[0].mxu0
      %v348 = vadd.f32 %v295, %v347
      %v349 = vpop.f32.mrb[0].mxu0
      %v350 = vpop.f32.mrb[0].mxu0
      %v351 = vadd.f32 %v295, %v350
      %v352 = vpop.f32.mrb[0].mxu0
      %353 = vdwg.mxu0
      %v354 = vmul.f32 %v348, 0.2
      %v355 = vmul.f32 %v351, 0.2
      %v356 = vmax.f32 %v348, %v354
      %v357 = vmax.f32 %v351, %v355
      %v358 = vpack.c.bf16 %v357, %v356
      %v359 = vld [vmem:[%s3] sm:$0xf]
      %v360 = vld [vmem:[%s3 + $0x4] sm:$0xf]
      %v361 = vld [vmem:[%s3 + $0x8] sm:$0xf]
      %v362 = vld [vmem:[%s3 + $0xc] sm:$0xf]
      %v363 = vld [vmem:[%s3 + $0x10] sm:$0xf]
      %v364 = vld [vmem:[%s3 + $0x14] sm:$0xf]
      %v365 = vld [vmem:[%s3 + $0x18] sm:$0xf]
      %v366 = vld [vmem:[%s3 + $0x1c] sm:$0xf]
      %v367 = vld [vmem:[%s3 + $0x20] sm:$0xf]
      %v368 = vld [vmem:[%s3 + $0x24] sm:$0xf]
      %v369 = vld [vmem:[%s3 + $0x28] sm:$0xf]
      %v370 = vld [vmem:[%s3 + $0x2c] sm:$0xf]
      %v371 = vld [vmem:[%s3 + $0x30] sm:$0xf]
      %v372 = vld [vmem:[%s3 + $0x34] sm:$0xf]
      %v373 = vld [vmem:[%s3 + $0x38] sm:$0xf]
      %v374 = vld [vmem:[%s3 + $0x3c] sm:$0xf]
      %v375 = vld [vmem:[%s4] sm:$0x1]
      %v377 = vlaneseq
      %v378 = vshrl.u32 %v377, 7
      %v379 = vsub.s32 0, %v378
      %v380 = vrot.slane %v375, %v379
      %v398 = vunpack.c.l.b16 %v359
      %v399 = vunpack.c.l.b16 %v360
      %v400 = vunpack.c.l.b16 %v361
      %v401 = vunpack.c.l.b16 %v362
      %v402 = vunpack.c.l.b16 %v363
      %v403 = vunpack.c.l.b16 %v364
      %v404 = vunpack.c.l.b16 %v365
      %v405 = vunpack.c.l.b16 %v366
      %v406 = vunpack.c.l.b16 %v367
      %v407 = vunpack.c.l.b16 %v368
      %v408 = vunpack.c.l.b16 %v369
      %v409 = vunpack.c.l.b16 %v370
      %v410 = vunpack.c.l.b16 %v371
      %v411 = vunpack.c.l.b16 %v372
      %v412 = vunpack.c.l.b16 %v373
      %v413 = vunpack.c.l.b16 %v374
      %v414 = vpack.c.b16 %v399, %v398
      %v415 = vpack.c.b16 %v401, %v400
      %v416 = vpack.c.b16 %v403, %v402
      %v417 = vpack.c.b16 %v405, %v404
      %v418 = vpack.c.b16 %v407, %v406
      %v419 = vpack.c.b16 %v409, %v408
      %v420 = vpack.c.b16 %v411, %v410
      %v421 = vpack.c.b16 %v413, %v412
      %430 = vmatprep.subr.bf16.mxu0 0
      %431 = vmatpush1.bf16.msra.mxu0 %v414
      %432 = vmatprep.subr.bf16.mxu0 0
      %433 = vmatpush1.bf16.msra.mxu0 %v415
      %434 = vmatprep.subr.bf16.mxu0 0
      %435 = vmatpush1.bf16.msra.mxu0 %v416
      %436 = vmatprep.subr.bf16.mxu0 0
      %437 = vmatpush1.bf16.msra.mxu0 %v417
      %438 = vmatprep.subr.bf16.mxu0 0
      %439 = vmatpush1.bf16.msra.mxu0 %v418
      %440 = vmatprep.subr.bf16.mxu0 0
      %441 = vmatpush1.bf16.msra.mxu0 %v419
      %442 = vmatprep.subr.bf16.mxu0 0
      %443 = vmatpush1.bf16.msra.mxu0 %v420
      %444 = vmatprep.subr.bf16.mxu0 0
      %445 = vmatpush1.bf16.msra.mxu0 %v421
      %446 = vmatprep.subr.bf16.mxu0 0
      %447 = vmatpush1.bf16.msra.mxu0 0
      %448 = vmatprep.subr.bf16.mxu0 0
      %449 = vmatpush1.bf16.msra.mxu0 0
      %450 = vmatprep.subr.bf16.mxu0 0
      %451 = vmatpush1.bf16.msra.mxu0 0
      %452 = vmatprep.subr.bf16.mxu0 0
      %453 = vmatpush1.bf16.msra.mxu0 0
      %454 = vmatprep.subr.bf16.mxu0 0
      %455 = vmatpush1.bf16.msra.mxu0 0
      %456 = vmatprep.subr.bf16.mxu0 0
      %457 = vmatpush1.bf16.msra.mxu0 0
      %458 = vmatprep.subr.bf16.mxu0 0
      %459 = vmatpush1.bf16.msra.mxu0 0
      %460 = vmatprep.subr.bf16.mxu0 0
      %461 = vmatpush1.bf16.msra.mxu0 0
      %462 = vmatprep.mubr.bf16.mxu0 0
      %463 = vmatmul.mubr.bf16.gmra.mrb[0].mxu0 %v358
      %v464 = vpop.f32.mrb[0].mxu0
      %v465 = vadd.f32 %v380, %v464
      %v466 = vpop.f32.mrb[0].mxu0
      %v467 = vpop.f32.mrb[0].mxu0
      %v468 = vadd.f32 %v380, %v467
      %v469 = vpop.f32.mrb[0].mxu0
      %470 = vdwg.mxu0
      %v471 = vmul.f32 %v465, 0.2
      %v472 = vmul.f32 %v468, 0.2
      %v473 = vmax.f32 %v465, %v471
      %v474 = vmax.f32 %v468, %v472
      %v475 = vpack.c.bf16 %v474, %v473
      %v476 = vld [vmem:[%s5] sm:$0xf]
      %v477 = vld [vmem:[%s5 + $0x4] sm:$0xf]
      %v478 = vld [vmem:[%s5 + $0x8] sm:$0xf]
      %v479 = vld [vmem:[%s5 + $0xc] sm:$0xf]
      %v480 = vld [vmem:[%s5 + $0x10] sm:$0xf]
      %v481 = vld [vmem:[%s5 + $0x14] sm:$0xf]
      %v482 = vld [vmem:[%s5 + $0x18] sm:$0xf]
      %v483 = vld [vmem:[%s5 + $0x1c] sm:$0xf]
      %v484 = vld [vmem:[%s5 + $0x20] sm:$0xf]
      %v485 = vld [vmem:[%s5 + $0x24] sm:$0xf]
      %v486 = vld [vmem:[%s5 + $0x28] sm:$0xf]
      %v487 = vld [vmem:[%s5 + $0x2c] sm:$0xf]
      %v488 = vld [vmem:[%s5 + $0x30] sm:$0xf]
      %v489 = vld [vmem:[%s5 + $0x34] sm:$0xf]
      %v490 = vld [vmem:[%s5 + $0x38] sm:$0xf]
      %v491 = vld [vmem:[%s5 + $0x3c] sm:$0xf]
      %v492 = vld [vmem:[%s6] sm:$0x1]
      %v494 = vlaneseq
      %v495 = vshrl.u32 %v494, 7
      %v496 = vsub.s32 0, %v495
      %v497 = vrot.slane %v492, %v496
      %v515 = vunpack.c.l.b16 %v476
      %v516 = vunpack.c.l.b16 %v477
      %v517 = vunpack.c.l.b16 %v478
      %v518 = vunpack.c.l.b16 %v479
      %v519 = vunpack.c.l.b16 %v480
      %v520 = vunpack.c.l.b16 %v481
      %v521 = vunpack.c.l.b16 %v482
      %v522 = vunpack.c.l.b16 %v483
      %v523 = vunpack.c.l.b16 %v484
      %v524 = vunpack.c.l.b16 %v485
      %v525 = vunpack.c.l.b16 %v486
      %v526 = vunpack.c.l.b16 %v487
      %v527 = vunpack.c.l.b16 %v488
      %v528 = vunpack.c.l.b16 %v489
      %v529 = vunpack.c.l.b16 %v490
      %v530 = vunpack.c.l.b16 %v491
      %v531 = vpack.c.b16 %v516, %v515
      %v532 = vpack.c.b16 %v518, %v517
      %v533 = vpack.c.b16 %v520, %v519
      %v534 = vpack.c.b16 %v522, %v521
      %v535 = vpack.c.b16 %v524, %v523
      %v536 = vpack.c.b16 %v526, %v525
      %v537 = vpack.c.b16 %v528, %v527
      %v538 = vpack.c.b16 %v530, %v529
      %547 = vmatprep.subr.bf16.mxu0 0
      %548 = vmatpush1.bf16.msra.mxu0 %v531
      %549 = vmatprep.subr.bf16.mxu0 0
      %550 = vmatpush1.bf16.msra.mxu0 %v532
      %551 = vmatprep.subr.bf16.mxu0 0
      %552 = vmatpush1.bf16.msra.mxu0 %v533
      %553 = vmatprep.subr.bf16.mxu0 0
      %554 = vmatpush1.bf16.msra.mxu0 %v534
      %555 = vmatprep.subr.bf16.mxu0 0
      %556 = vmatpush1.bf16.msra.mxu0 %v535
      %557 = vmatprep.subr.bf16.mxu0 0
      %558 = vmatpush1.bf16.msra.mxu0 %v536
      %559 = vmatprep.subr.bf16.mxu0 0
      %560 = vmatpush1.bf16.msra.mxu0 %v537
      %561 = vmatprep.subr.bf16.mxu0 0
      %562 = vmatpush1.bf16.msra.mxu0 %v538
      %563 = vmatprep.subr.bf16.mxu0 0
      %564 = vmatpush1.bf16.msra.mxu0 0
      %565 = vmatprep.subr.bf16.mxu0 0
      %566 = vmatpush1.bf16.msra.mxu0 0
      %567 = vmatprep.subr.bf16.mxu0 0
      %568 = vmatpush1.bf16.msra.mxu0 0
      %569 = vmatprep.subr.bf16.mxu0 0
      %570 = vmatpush1.bf16.msra.mxu0 0
      %571 = vmatprep.subr.bf16.mxu0 0
      %572 = vmatpush1.bf16.msra.mxu0 0
      %573 = vmatprep.subr.bf16.mxu0 0
      %574 = vmatpush1.bf16.msra.mxu0 0
      %575 = vmatprep.subr.bf16.mxu0 0
      %576 = vmatpush1.bf16.msra.mxu0 0
      %577 = vmatprep.subr.bf16.mxu0 0
      %578 = vmatpush1.bf16.msra.mxu0 0
      %579 = vmatprep.mubr.bf16.mxu0 0
      %580 = vmatmul.mubr.bf16.gmra.mrb[0].mxu0 %v475
      %v581 = vpop.f32.mrb[0].mxu0
      %v582 = vadd.f32 %v497, %v581
      %v583 = vpop.f32.mrb[0].mxu0
      %v584 = vpop.f32.mrb[0].mxu0
      %v585 = vadd.f32 %v497, %v584
      %v586 = vpop.f32.mrb[0].mxu0
      %587 = vdwg.mxu0
      %v588 = vmul.f32 %v582, 0.2
      %v589 = vmul.f32 %v585, 0.2
      %v590 = vmax.f32 %v582, %v588
      %v591 = vmax.f32 %v585, %v589
      %vm592 = vcmask 7168
      %593 = vst.msk [vmem:[%s280] sm:$0xff] %vm592, %v590
      %594 = vst.msk [vmem:[%s280 + $0x8] sm:$0xff] %vm592, %v591
      %s595 = smul.u32 2, %s18
      %p596 = scmp.lt.s32.totalorder %s595, 5
      %s597 = scalar_select %p596, %s595, 5
      %s598 = smul.addr %s597, 8
      %s599 = scalar_lea.vmem %s7, %s598
      // Predicated region
      $region49: #{discriminator_forward.1} parent=47 // pred_check
        %p600 = pneg %p188
      $region50: #{discriminator_forward.1} parent=47 // pred_check_branch
        %602 = sbr.rel (%p600) target = $region52
      $region51: #{discriminator_forward.1} parent=47 // pred_region
        %s603 = smul.u32 2, %s18
      $region52: #{discriminator_forward.1} parent=47 // pred_fallthru
        _
    $region48: #{discriminator_forward.1} parent=5 // pred_fallthru
      _
    %p604 = scmp.le.s32.totalorder 2, %s13
    // Predicated region
    $region53: #{discriminator_forward.1} parent=5 // pred_check
      %p605 = pneg %p604
    $region54: #{discriminator_forward.1} parent=5 // pred_check_branch
      %607 = sbr.rel (%p605) target = $region56
    $region55: #{discriminator_forward.1} parent=5 // pred_region
      %s608 = ssub.s32 %s13, 2
      // Predicated region
      $region57: #{discriminator_forward.1} parent=55 // pred_check
        %p609 = pneg %p194
      $region58: #{discriminator_forward.1} parent=55 // pred_check_branch
        %611 = sbr.rel (%p609) target = $region60
      $region59: #{discriminator_forward.1} parent=55 // pred_region
        %s612 = smul.u32 2, %s19
        %p613 = scmp.lt.s32.totalorder %s612, 5
        %s614 = scalar_select %p613, %s612, 5
        %s615 = smul.addr %s614, 8
        %s616 = scalar_lea.vmem %s7, %s615
      $region60: #{discriminator_forward.1} parent=55 // pred_fallthru
        _
    $region56: #{discriminator_forward.1} parent=5 // pred_fallthru
      _
  $region6: #{discriminator_forward.1} parent=0 // loop_footer
    %s17 = sadd.s32 1, %s13
  $region7: #{discriminator_forward.1} parent=0 // loop_footer_branch
    %12 = sbr.rel target = $region3
  $region8: #{discriminator_forward.1} parent=0 // loop_exit
    _

</llo_original>
